<compile_context>
chip_gen: v5e
topology: v5e:2x2
jax: 0.10.0
libtpu: 0.0.40
codegen_flags: <defaults>
</compile_context>

<pallas_src>
import functools

import jax
import jax.numpy as jnp
from jax.experimental import pallas as pl
from jax.experimental.pallas import tpu as pltpu

INPUT_DIM = 8
FC1_DIM = 400
FC2_DIM = 200
OUT_DIM = 2

# Lane-padded hidden widths (multiples of 128). Extra units are zero-weight /
# zero-bias so the forward math is identical to the un-padded network.
FC1_PAD = 512
FC2_PAD = 256

DEFAULT_TILE_B = 1024  # batch rows per grid step (sized for v7x 64 MiB VMEM)


def actor_kernel(x_ref, w1_ref, b1_ref, w2_ref, b2_ref, w3_ref, b3_ref, o_ref):
    # bf16 MXU operands, f32 accumulation; f32 epilogues (bias/ReLU/tanh).
    x = x_ref[...].astype(jnp.bfloat16)                               # (tB, 8)

    h1 = jnp.dot(x, w1_ref[...], preferred_element_type=jnp.float32)
    h1 = jnp.maximum(h1 + b1_ref[...], 0.0)                           # (tB, 512) f32

    h2 = jnp.dot(h1.astype(jnp.bfloat16), w2_ref[...],
                 preferred_element_type=jnp.float32)
    h2 = jnp.maximum(h2 + b2_ref[...], 0.0)                           # (tB, 256) f32

    h3 = jnp.dot(h2.astype(jnp.bfloat16), w3_ref[...],
                 preferred_element_type=jnp.float32)
    o_ref[...] = jnp.tanh(h3 + b3_ref[...]).astype(o_ref.dtype)       # (tB, 2)


def _round_up(x, m):
    return ((x + m - 1) // m) * m


def _vmem_estimate_bytes(tile_b):
    """Per-step VMEM footprint estimate for right-sizing vmem_limit_bytes."""
    weights = (INPUT_DIM * FC1_PAD + FC1_PAD * FC2_PAD + FC2_PAD * OUT_DIM) * 2  # bf16
    biases = (FC1_PAD + FC2_PAD + OUT_DIM) * 4
    x_io = 2 * tile_b * INPUT_DIM * 4            # double-buffered input tile
    o_io = 2 * tile_b * OUT_DIM * 4              # double-buffered output tile
    acts = tile_b * (FC1_PAD + FC2_PAD) * (4 + 2)  # f32 activations + bf16 casts
    return weights + biases + x_io + o_io + acts


@functools.partial(jax.jit, static_argnames=("tile_b",))
def actor_forward(state, packed_params, tile_b=DEFAULT_TILE_B):
    """state: (B, 8) f32. packed_params: output of pack_params(). Returns (B, 2) f32."""
    B = state.shape[0]
    b_pad = _round_up(B, 8)
    tb = min(tile_b, b_pad)
    b_pad = _round_up(b_pad, tb)
    if b_pad != B:
        state = jnp.pad(state, ((0, b_pad - B), (0, 0)))

    w1, b1 = packed_params["w1"], packed_params["b1"]
    w2, b2 = packed_params["w2"], packed_params["b2"]
    w3, b3 = packed_params["w3"], packed_params["b3"]

    # Weights / biases: full-array blocks, constant index_map -> VMEM-resident
    # across all batch tiles.
    resident = lambda shape: pl.BlockSpec(shape, lambda i: (0,) * len(shape))

    vmem_limit = min(max(4 * _vmem_estimate_bytes(tb), 4 << 20), 64 << 20)

    out = pl.pallas_call(
        actor_kernel,
        out_shape=jax.ShapeDtypeStruct((b_pad, OUT_DIM), jnp.float32),
        grid=(b_pad // tb,),
        in_specs=[
            pl.BlockSpec((tb, INPUT_DIM), lambda i: (i, 0)),
            resident(w1.shape), resident(b1.shape),
            resident(w2.shape), resident(b2.shape),
            resident(w3.shape), resident(b3.shape),
        ],
        out_specs=pl.BlockSpec((tb, OUT_DIM), lambda i: (i, 0)),
        compiler_params=pltpu.CompilerParams(
            dimension_semantics=("parallel",),
            vmem_limit_bytes=vmem_limit,
        ),
    )(state, w1, b1, w2, b2, w3, b3)
    return out[:B]


def init_params(key):
    """Deterministic init mimicking PyTorch nn.Linear default:
    U(-1/sqrt(fan_in), 1/sqrt(fan_in)). Weights stored as (in, out) so the
    kernel computes y = x @ W + b (same math as x @ W_pt.T + b)."""
    def linear(k, fan_in, fan_out):
        kw, kb = jax.random.split(k)
        bound = 1.0 / jnp.sqrt(float(fan_in))
        w = jax.random.uniform(kw, (fan_in, fan_out), jnp.float32, -bound, bound)
        b = jax.random.uniform(kb, (1, fan_out), jnp.float32, -bound, bound)
        return w, b

    k1, k2, k3 = jax.random.split(key, 3)
    w1, b1 = linear(k1, INPUT_DIM, FC1_DIM)
    w2, b2 = linear(k2, FC1_DIM, FC2_DIM)
    w3, b3 = linear(k3, FC2_DIM, OUT_DIM)
    return {"w1": w1, "b1": b1, "w2": w2, "b2": b2, "w3": w3, "b3": b3}


def pack_params(params):
    """Zero-pad hidden dims to multiples of 128 and cast weights to bf16 for
    the kernel. Biases stay f32 (epilogue math is f32)."""
    def pad2(a, rows, cols):
        r, c = a.shape
        return jnp.pad(a, ((0, rows - r), (0, cols - c)))

    return {
        "w1": pad2(params["w1"], INPUT_DIM, FC1_PAD).astype(jnp.bfloat16),
        "b1": pad2(params["b1"], 1, FC1_PAD),
        "w2": pad2(params["w2"], FC1_PAD, FC2_PAD).astype(jnp.bfloat16),
        "b2": pad2(params["b2"], 1, FC2_PAD),
        "w3": pad2(params["w3"], FC2_PAD, OUT_DIM).astype(jnp.bfloat16),
        "b3": params["b3"],
    }


def actor_forward_ref(state, params):
    """Pure-JAX f32 reference (un-padded weights) for correctness checking."""
    h1 = jax.nn.relu(state @ params["w1"] + params["b1"])
    h2 = jax.nn.relu(h1 @ params["w2"] + params["b2"])
    return jnp.tanh(h2 @ params["w3"] + params["b3"])


if __name__ == "__main__":
    key = jax.random.PRNGKey(0)
    kp, kx1, kx2 = jax.random.split(key, 3)

    params = init_params(kp)
    packed = pack_params(params)

    # Small batch: single grid step.
    B1 = 8
    state1 = jax.random.normal(kx1, (B1, INPUT_DIM), jnp.float32)
    act1 = jax.block_until_ready(actor_forward(state1, packed))
    ref1 = actor_forward_ref(state1, params)
    assert act1.shape == (B1, OUT_DIM)
    assert jnp.allclose(act1, ref1, atol=2e-2, rtol=0.0), "mismatch vs reference (B=8)"

    # Ragged batch + multi-tile grid: exercises batch padding and the
    # pipelined "parallel" batch axis with resident weights.
    B2 = 40
    state2 = jax.random.normal(kx2, (B2, INPUT_DIM), jnp.float32)
    act2 = jax.block_until_ready(actor_forward(state2, packed, tile_b=16))
    ref2 = actor_forward_ref(state2, params)
    assert act2.shape == (B2, OUT_DIM)
    assert jnp.allclose(act2, ref2, atol=2e-2, rtol=0.0), "mismatch vs reference (B=40)"

    print("KERNEL_OK")
</pallas_src>

<mosaic_0001>
module attributes {stable_mosaic.version = 11 : i64} {
  func.func @actor_kernel(%arg0: i32, %arg1: memref<8x8xf32, #tpu.memory_space<vmem>>, %arg2: memref<8x512xbf16, #tpu.memory_space<vmem>>, %arg3: memref<1x512xf32, #tpu.memory_space<vmem>>, %arg4: memref<512x256xbf16, #tpu.memory_space<vmem>>, %arg5: memref<1x256xf32, #tpu.memory_space<vmem>>, %arg6: memref<256x2xbf16, #tpu.memory_space<vmem>>, %arg7: memref<1x2xf32, #tpu.memory_space<vmem>>, %arg8: memref<8x2xf32, #tpu.memory_space<vmem>>) attributes {dimension_semantics = [#tpu.dimension_semantics<parallel>], iteration_bounds = array<i64: 1>, scalar_prefetch = 0 : i64, scratch_operands = 0 : i64, tpu.core_type = #tpu.core_type<tc>, window_params = [{transform_indices = @transform_0, window_bounds = array<i64: 8, 8>}, {pipeline_mode = #tpu.pipeline_mode<synchronous>, transform_indices = @transform_1, window_bounds = array<i64: 8, 512>}, {pipeline_mode = #tpu.pipeline_mode<synchronous>, transform_indices = @transform_2, window_bounds = array<i64: 1, 512>}, {pipeline_mode = #tpu.pipeline_mode<synchronous>, transform_indices = @transform_3, window_bounds = array<i64: 512, 256>}, {pipeline_mode = #tpu.pipeline_mode<synchronous>, transform_indices = @transform_4, window_bounds = array<i64: 1, 256>}, {pipeline_mode = #tpu.pipeline_mode<synchronous>, transform_indices = @transform_5, window_bounds = array<i64: 256, 2>}, {pipeline_mode = #tpu.pipeline_mode<synchronous>, transform_indices = @transform_6, window_bounds = array<i64: 1, 2>}, {transform_indices = @transform_7, window_bounds = array<i64: 8, 2>}]} {
    %c0 = arith.constant 0 : index
    %c0_0 = arith.constant 0 : index
    %0 = vector.load %arg1[%c0, %c0_0] : memref<8x8xf32, #tpu.memory_space<vmem>>, vector<8x8xf32>
    %1 = arith.truncf %0 : vector<8x8xf32> to vector<8x8xbf16>
    %c0_1 = arith.constant 0 : index
    %c0_2 = arith.constant 0 : index
    %2 = vector.load %arg2[%c0_1, %c0_2] : memref<8x512xbf16, #tpu.memory_space<vmem>>, vector<8x512xbf16>
    %cst = arith.constant dense<0.000000e+00> : vector<8x512xf32>
    %3 = tpu.matmul %1, %2, %cst {dimension_numbers = #tpu.dot_dimension_numbers<[1], [0], [0], [1], [0, 0, 1, 1], [], []>} : vector<8x8xbf16>, vector<8x512xbf16>, vector<8x512xf32> -> vector<8x512xf32>
    %c0_3 = arith.constant 0 : index
    %c0_4 = arith.constant 0 : index
    %4 = vector.load %arg3[%c0_3, %c0_4] : memref<1x512xf32, #tpu.memory_space<vmem>>, vector<1x512xf32>
    %5 = vector.broadcast %4 : vector<1x512xf32> to vector<8x512xf32>
    %6 = arith.addf %3, %5 : vector<8x512xf32>
    %cst_5 = arith.constant 0.000000e+00 : f32
    %7 = vector.broadcast %cst_5 : f32 to vector<8x512xf32>
    %8 = arith.maximumf %6, %7 : vector<8x512xf32>
    %9 = arith.truncf %8 : vector<8x512xf32> to vector<8x512xbf16>
    %c0_6 = arith.constant 0 : index
    %c0_7 = arith.constant 0 : index
    %10 = vector.load %arg4[%c0_6, %c0_7] : memref<512x256xbf16, #tpu.memory_space<vmem>>, vector<512x256xbf16>
    %cst_8 = arith.constant dense<0.000000e+00> : vector<8x256xf32>
    %11 = tpu.matmul %9, %10, %cst_8 {dimension_numbers = #tpu.dot_dimension_numbers<[1], [0], [0], [1], [0, 0, 1, 1], [], []>} : vector<8x512xbf16>, vector<512x256xbf16>, vector<8x256xf32> -> vector<8x256xf32>
    %c0_9 = arith.constant 0 : index
    %c0_10 = arith.constant 0 : index
    %12 = vector.load %arg5[%c0_9, %c0_10] : memref<1x256xf32, #tpu.memory_space<vmem>>, vector<1x256xf32>
    %13 = vector.broadcast %12 : vector<1x256xf32> to vector<8x256xf32>
    %14 = arith.addf %11, %13 : vector<8x256xf32>
    %cst_11 = arith.constant 0.000000e+00 : f32
    %15 = vector.broadcast %cst_11 : f32 to vector<8x256xf32>
    %16 = arith.maximumf %14, %15 : vector<8x256xf32>
    %17 = arith.truncf %16 : vector<8x256xf32> to vector<8x256xbf16>
    %c0_12 = arith.constant 0 : index
    %c0_13 = arith.constant 0 : index
    %18 = vector.load %arg6[%c0_12, %c0_13] : memref<256x2xbf16, #tpu.memory_space<vmem>>, vector<256x2xbf16>
    %cst_14 = arith.constant dense<0.000000e+00> : vector<8x2xf32>
    %19 = tpu.matmul %17, %18, %cst_14 {dimension_numbers = #tpu.dot_dimension_numbers<[1], [0], [0], [1], [0, 0, 1, 1], [], []>} : vector<8x256xbf16>, vector<256x2xbf16>, vector<8x2xf32> -> vector<8x2xf32>
    %c0_15 = arith.constant 0 : index
    %c0_16 = arith.constant 0 : index
    %20 = vector.load %arg7[%c0_15, %c0_16] : memref<1x2xf32, #tpu.memory_space<vmem>>, vector<1x2xf32>
    %21 = vector.broadcast %20 : vector<1x2xf32> to vector<8x2xf32>
    %22 = arith.addf %19, %21 : vector<8x2xf32>
    %23 = math.tanh %22 : vector<8x2xf32>
    %c0_17 = arith.constant 0 : index
    %c0_18 = arith.constant 0 : index
    %24 = vector.load %arg8[%c0_17, %c0_18] : memref<8x2xf32, #tpu.memory_space<vmem>>, vector<8x2xf32>
    tpu.vector_store %arg8[%c0_17, %c0_18], %23 {strides = array<i32>} : memref<8x2xf32, #tpu.memory_space<vmem>>, vector<8x2xf32>,
    return
  }
  func.func @transform_0(%arg0: i32) -> (i32, i32) {
    %c0_i32 = arith.constant 0 : i32
    %c0_i32_0 = arith.constant 0 : i32
    return %arg0, %c0_i32 : i32, i32
  }
  func.func @transform_1(%arg0: i32) -> (i32, i32) {
    %c0_i32 = arith.constant 0 : i32
    %c0_i32_0 = arith.constant 0 : i32
    %c0_i32_1 = arith.constant 0 : i32
    return %c0_i32, %c0_i32_0 : i32, i32
  }
  func.func @transform_2(%arg0: i32) -> (i32, i32) {
    %c0_i32 = arith.constant 0 : i32
    %c0_i32_0 = arith.constant 0 : i32
    %c0_i32_1 = arith.constant 0 : i32
    return %c0_i32, %c0_i32_0 : i32, i32
  }
  func.func @transform_3(%arg0: i32) -> (i32, i32) {
    %c0_i32 = arith.constant 0 : i32
    %c0_i32_0 = arith.constant 0 : i32
    %c0_i32_1 = arith.constant 0 : i32
    return %c0_i32, %c0_i32_0 : i32, i32
  }
  func.func @transform_4(%arg0: i32) -> (i32, i32) {
    %c0_i32 = arith.constant 0 : i32
    %c0_i32_0 = arith.constant 0 : i32
    %c0_i32_1 = arith.constant 0 : i32
    return %c0_i32, %c0_i32_0 : i32, i32
  }
  func.func @transform_5(%arg0: i32) -> (i32, i32) {
    %c0_i32 = arith.constant 0 : i32
    %c0_i32_0 = arith.constant 0 : i32
    %c0_i32_1 = arith.constant 0 : i32
    return %c0_i32, %c0_i32_0 : i32, i32
  }
  func.func @transform_6(%arg0: i32) -> (i32, i32) {
    %c0_i32 = arith.constant 0 : i32
    %c0_i32_0 = arith.constant 0 : i32
    %c0_i32_1 = arith.constant 0 : i32
    return %c0_i32, %c0_i32_0 : i32, i32
  }
  func.func @transform_7(%arg0: i32) -> (i32, i32) {
    %c0_i32 = arith.constant 0 : i32
    %c0_i32_0 = arith.constant 0 : i32
    return %arg0, %c0_i32 : i32, i32
  }
}

</mosaic_0001>

<llo_original>
// kernel: actor_forward.1
$region0: #{actor_forward.1}
  #allocation0 [shape = 'u32[]', space=smem, size = 0x4, offset = 0x4, fixed_abs, tag = 'smem constant byte address 0x4 - core index']
  #allocation1 [shape = 'u32[72,128]{1,0:T(1,128)}', space=vmem, size = 0x9000, scoped, tag = 'internal scratch']
  %s0 = inlined_call_operand.vmem [shape: f32[8,8], index: 0, kind: input, shape index: {}]
  %s1 = inlined_call_operand.vmem [shape: bf16[8,512], index: 1, kind: input, shape index: {}]
  %s2 = inlined_call_operand.vmem [shape: f32[1,512], index: 2, kind: input, shape index: {}]
  %s3 = inlined_call_operand.hbm [shape: bf16[512,256], index: 3, kind: input, shape index: {}]
  %s4 = inlined_call_operand.vmem [shape: f32[1,256], index: 4, kind: input, shape index: {}]
  %s5 = inlined_call_operand.vmem [shape: bf16[256,2], index: 5, kind: input, shape index: {}]
  %s6 = inlined_call_operand.vmem [shape: f32[1,2], index: 6, kind: input, shape index: {}]
  %s7 = inlined_call_operand.vmem [shape: f32[8,2], index: 7, kind: output, shape index: {}]
  %s8 = sld [smem:[#allocation0]]
  $region42: #{actor_forward.1} parent=0
    _
  %s10 = ssub.s32 1, %s8
  %s11 = scalar_select 0, %s10, %s8
  $region1: #{actor_forward.1} parent=0
    #allocation2 [shape = 'u8[262144]{0}', space=vmem, size = 0x40000, scoped, tag = 'input window, operand 3, single buffered']
    #allocation3 [shape = 's32[1]{0}', space=sflag, size = 0x4, scoped, tag = 'scoped memory for actor_forward.1']
    %12 = vsyncpa [#allocation3], 0
    // Predicated region
    $region2: #{actor_forward.1} parent=1 // pred_check
      _
    $region3: #{actor_forward.1} parent=1 // pred_check_branch
      %14 = sbr.rel (0) target = $region5
    $region4: #{actor_forward.1} parent=1 // pred_region
      _
    $region5: #{actor_forward.1} parent=1 // pred_fallthru
      _
    // Predicated region
    $region6: #{actor_forward.1} parent=1 // pred_check
      _
    $region7: #{actor_forward.1} parent=1 // pred_check_branch
      %16 = sbr.rel (0) target = $region9
    $region8: #{actor_forward.1} parent=1 // pred_region
      _
    $region9: #{actor_forward.1} parent=1 // pred_fallthru
      _
    // Predicated region
    $region10: #{actor_forward.1} parent=1 // pred_check
      _
    $region11: #{actor_forward.1} parent=1 // pred_check_branch
      %18 = sbr.rel (0) target = $region13
    $region12: #{actor_forward.1} parent=1 // pred_region
      _
    $region13: #{actor_forward.1} parent=1 // pred_fallthru
      _
    // Predicated region
    $region14: #{actor_forward.1} parent=1 // pred_check
      _
    $region15: #{actor_forward.1} parent=1 // pred_check_branch
      %20 = sbr.rel (0) target = $region17
    $region16: #{actor_forward.1} parent=1 // pred_region
      %22 = vsyncadd [#allocation3], 0
      %s23 = sshll.u32 %s3, 4
      %s24 = int_to_ptr.hbm [resolvable:$true] %s23
      %s25 = sshll.u32 [#allocation2], 4
      %s26 = int_to_ptr.vmem [resolvable:$true] %s25
      %31 = dma.hbm_to_vmem [thread:$0]  %s24, 8192, %s26, [#allocation3], 128, 128, 8
    $region17: #{actor_forward.1} parent=1 // pred_fallthru
      _
    // Predicated region
    $region18: #{actor_forward.1} parent=1 // pred_check
      _
    $region19: #{actor_forward.1} parent=1 // pred_check_branch
      %33 = sbr.rel (0) target = $region21
    $region20: #{actor_forward.1} parent=1 // pred_region
      _
    $region21: #{actor_forward.1} parent=1 // pred_fallthru
      _
    // Predicated region
    $region22: #{actor_forward.1} parent=1 // pred_check
      _
    $region23: #{actor_forward.1} parent=1 // pred_check_branch
      %35 = sbr.rel (0) target = $region25
    $region24: #{actor_forward.1} parent=1 // pred_region
      _
    $region25: #{actor_forward.1} parent=1 // pred_fallthru
      _
    // Predicated region
    $region26: #{actor_forward.1} parent=1 // pred_check
      _
    $region27: #{actor_forward.1} parent=1 // pred_check_branch
      %37 = sbr.rel (0) target = $region29
    $region28: #{actor_forward.1} parent=1 // pred_region
      _
    $region29: #{actor_forward.1} parent=1 // pred_fallthru
      _
    // Predicated region
    $region30: #{actor_forward.1} parent=1 // pred_check
      _
    $region31: #{actor_forward.1} parent=1 // pred_check_branch
      %39 = sbr.rel (0) target = $region33
    $region32: #{actor_forward.1} parent=1 // pred_region
      %41 = dma.done [#allocation3], 8192
    $region33: #{actor_forward.1} parent=1 // pred_fallthru
      _
    %v43 = vld [vmem:[%s0] sm:$0xff]
    %v44 = vpack.c.bf16 %v43, %v43
    %v45 = vld [vmem:[%s1] sm:$0xff]
    %v46 = vld [vmem:[%s1 + $0x8] sm:$0xff]
    %v47 = vld [vmem:[%s2] sm:$0xf]
    %v49 = vperm.slane %v47, 0
    %v50 = vperm.slane %v47, 1
    %v51 = vperm.slane %v47, 2
    %v52 = vperm.slane %v47, 3
    %v59 = vunpack.c.l.b16 %v45
    %v60 = vunpack.c.h.b16 %v45
    %v61 = vunpack.c.l.b16 %v46
    %v62 = vunpack.c.h.b16 %v46
    %v63 = vpack.c.b16 %v59, %v59
    %v64 = vpack.c.b16 %v60, %v60
    %v65 = vpack.c.b16 %v61, %v61
    %v66 = vpack.c.b16 %v62, %v62
    %vm67 = vcmask 64512
    %v69 = vsel %vm67, %v44, 0
    %vm71 = vcmask 1043456
    %v73 = vsel %vm71, %v63, 0
    %v76 = vsel %vm71, %v64, 0
    %v79 = vsel %vm71, %v65, 0
    %v82 = vsel %vm71, %v66, 0
    %84 = vmatpush.bf16.msra.mxu0 0
    %85 = vmatpush.bf16.msra.mxu0 0
    %86 = vmatpush.bf16.msra.mxu0 0
    %87 = vmatpush.bf16.msra.mxu0 0
    %88 = vmatpush.bf16.msra.mxu0 0
    %89 = vmatpush.bf16.msra.mxu0 0
    %90 = vmatpush.bf16.msra.mxu0 0
    %91 = vmatpush.bf16.msra.mxu0 %v73
    %92 = vmatmul.bf16.gmra.mxu0 %v69
    %v93 = vpop.f32.mrf.mxu0
    %v94 = vadd.f32 %v49, %v93
    %v95 = vpop.f32.mrf.mxu0
    %96 = vdwg.mxu0
    %97 = vmatpush.bf16.msra.mxu0 0
    %98 = vmatpush.bf16.msra.mxu0 0
    %99 = vmatpush.bf16.msra.mxu0 0
    %100 = vmatpush.bf16.msra.mxu0 0
    %101 = vmatpush.bf16.msra.mxu0 0
    %102 = vmatpush.bf16.msra.mxu0 0
    %103 = vmatpush.bf16.msra.mxu0 0
    %104 = vmatpush.bf16.msra.mxu0 %v76
    %105 = vmatmul.bf16.gmra.mxu0 %v69
    %v106 = vpop.f32.mrf.mxu0
    %v107 = vadd.f32 %v50, %v106
    %v108 = vpop.f32.mrf.mxu0
    %109 = vdwg.mxu0
    %110 = vmatpush.bf16.msra.mxu0 0
    %111 = vmatpush.bf16.msra.mxu0 0
    %112 = vmatpush.bf16.msra.mxu0 0
    %113 = vmatpush.bf16.msra.mxu0 0
    %114 = vmatpush.bf16.msra.mxu0 0
    %115 = vmatpush.bf16.msra.mxu0 0
    %116 = vmatpush.bf16.msra.mxu0 0
    %117 = vmatpush.bf16.msra.mxu0 %v79
    %118 = vmatmul.bf16.gmra.mxu0 %v69
    %v119 = vpop.f32.mrf.mxu0
    %v120 = vadd.f32 %v51, %v119
    %v121 = vpop.f32.mrf.mxu0
    %122 = vdwg.mxu0
    %123 = vmatpush.bf16.msra.mxu0 0
    %124 = vmatpush.bf16.msra.mxu0 0
    %125 = vmatpush.bf16.msra.mxu0 0
    %126 = vmatpush.bf16.msra.mxu0 0
    %127 = vmatpush.bf16.msra.mxu0 0
    %128 = vmatpush.bf16.msra.mxu0 0
    %129 = vmatpush.bf16.msra.mxu0 0
    %130 = vmatpush.bf16.msra.mxu0 %v82
    %131 = vmatmul.bf16.gmra.mxu0 %v69
    %v132 = vpop.f32.mrf.mxu0
    %v133 = vadd.f32 %v52, %v132
    %v134 = vpop.f32.mrf.mxu0
    %135 = vdwg.mxu0
    %v136 = vmax.f32 %v94, 0.0
    %v137 = vmax.f32 %v107, 0.0
    %v138 = vmax.f32 %v120, 0.0
    %v139 = vmax.f32 %v133, 0.0
    %v140 = vpack.c.bf16 %v136, %v136
    %v141 = vpack.c.bf16 %v137, %v137
    %v142 = vpack.c.bf16 %v138, %v138
    %v143 = vpack.c.bf16 %v139, %v139
    %v144 = vld [vmem:[#allocation2] sm:$0xff]
    %v145 = vld [vmem:[#allocation2 + $0x8] sm:$0xff]
    %v146 = vld [vmem:[#allocation2 + $0x10] sm:$0xff]
    %v147 = vld [vmem:[#allocation2 + $0x18] sm:$0xff]
    %v148 = vld [vmem:[#allocation2 + $0x20] sm:$0xff]
    %v149 = vld [vmem:[#allocation2 + $0x28] sm:$0xff]
    %v150 = vld [vmem:[#allocation2 + $0x30] sm:$0xff]
    %v151 = vld [vmem:[#allocation2 + $0x38] sm:$0xff]
    %v152 = vld [vmem:[#allocation2 + $0x40] sm:$0xff]
    %v153 = vld [vmem:[#allocation2 + $0x48] sm:$0xff]
    %v154 = vld [vmem:[#allocation2 + $0x50] sm:$0xff]
    %v155 = vld [vmem:[#allocation2 + $0x58] sm:$0xff]
    %v156 = vld [vmem:[#allocation2 + $0x60] sm:$0xff]
    %v157 = vld [vmem:[#allocation2 + $0x68] sm:$0xff]
    %v158 = vld [vmem:[#allocation2 + $0x70] sm:$0xff]
    %v159 = vld [vmem:[#allocation2 + $0x78] sm:$0xff]
    %v160 = vld [vmem:[#allocation2 + $0x80] sm:$0xff]
    %v161 = vld [vmem:[#allocation2 + $0x88] sm:$0xff]
    %v162 = vld [vmem:[#allocation2 + $0x90] sm:$0xff]
    %v163 = vld [vmem:[#allocation2 + $0x98] sm:$0xff]
    %v164 = vld [vmem:[#allocation2 + $0xa0] sm:$0xff]
    %v165 = vld [vmem:[#allocation2 + $0xa8] sm:$0xff]
    %v166 = vld [vmem:[#allocation2 + $0xb0] sm:$0xff]
    %v167 = vld [vmem:[#allocation2 + $0xb8] sm:$0xff]
    %v168 = vld [vmem:[#allocation2 + $0xc0] sm:$0xff]
    %v169 = vld [vmem:[#allocation2 + $0xc8] sm:$0xff]
    %v170 = vld [vmem:[#allocation2 + $0xd0] sm:$0xff]
    %v171 = vld [vmem:[#allocation2 + $0xd8] sm:$0xff]
    %v172 = vld [vmem:[#allocation2 + $0xe0] sm:$0xff]
    %v173 = vld [vmem:[#allocation2 + $0xe8] sm:$0xff]
    %v174 = vld [vmem:[#allocation2 + $0xf0] sm:$0xff]
    %v175 = vld [vmem:[#allocation2 + $0xf8] sm:$0xff]
    %v176 = vld [vmem:[#allocation2 + $0x100] sm:$0xff]
    %v177 = vld [vmem:[#allocation2 + $0x108] sm:$0xff]
    %v178 = vld [vmem:[#allocation2 + $0x110] sm:$0xff]
    %v179 = vld [vmem:[#allocation2 + $0x118] sm:$0xff]
    %v180 = vld [vmem:[#allocation2 + $0x120] sm:$0xff]
    %v181 = vld [vmem:[#allocation2 + $0x128] sm:$0xff]
    %v182 = vld [vmem:[#allocation2 + $0x130] sm:$0xff]
    %v183 = vld [vmem:[#allocation2 + $0x138] sm:$0xff]
    %v184 = vld [vmem:[#allocation2 + $0x140] sm:$0xff]
    %v185 = vld [vmem:[#allocation2 + $0x148] sm:$0xff]
    %v186 = vld [vmem:[#allocation2 + $0x150] sm:$0xff]
    %v187 = vld [vmem:[#allocation2 + $0x158] sm:$0xff]
    %v188 = vld [vmem:[#allocation2 + $0x160] sm:$0xff]
    %v189 = vld [vmem:[#allocation2 + $0x168] sm:$0xff]
    %v190 = vld [vmem:[#allocation2 + $0x170] sm:$0xff]
    %v191 = vld [vmem:[#allocation2 + $0x178] sm:$0xff]
    %v192 = vld [vmem:[#allocation2 + $0x180] sm:$0xff]
    %v193 = vld [vmem:[#allocation2 + $0x188] sm:$0xff]
    %v194 = vld [vmem:[#allocation2 + $0x190] sm:$0xff]
    %v195 = vld [vmem:[#allocation2 + $0x198] sm:$0xff]
    %v196 = vld [vmem:[#allocation2 + $0x1a0] sm:$0xff]
    %v197 = vld [vmem:[#allocation2 + $0x1a8] sm:$0xff]
    %v198 = vld [vmem:[#allocation2 + $0x1b0] sm:$0xff]
    %v199 = vld [vmem:[#allocation2 + $0x1b8] sm:$0xff]
    %v200 = vld [vmem:[#allocation2 + $0x1c0] sm:$0xff]
    %v201 = vld [vmem:[#allocation2 + $0x1c8] sm:$0xff]
    %v202 = vld [vmem:[#allocation2 + $0x1d0] sm:$0xff]
    %v203 = vld [vmem:[#allocation2 + $0x1d8] sm:$0xff]
    %v204 = vld [vmem:[#allocation2 + $0x1e0] sm:$0xff]
    %v205 = vld [vmem:[#allocation2 + $0x1e8] sm:$0xff]
    %v206 = vld [vmem:[#allocation2 + $0x1f0] sm:$0xff]
    %v207 = vld [vmem:[#allocation2 + $0x1f8] sm:$0xff]
    %v208 = vld [vmem:[%s4] sm:$0x3]
    %v210 = vperm.slane %v208, 0
    %v211 = vperm.slane %v208, 1
    %v278 = vunpack.c.l.b16 %v144
    %v279 = vunpack.c.h.b16 %v144
    %v280 = vunpack.c.l.b16 %v145
    %v281 = vunpack.c.h.b16 %v145
    %v282 = vunpack.c.l.b16 %v146
    %v283 = vunpack.c.h.b16 %v146
    %v284 = vunpack.c.l.b16 %v147
    %v285 = vunpack.c.h.b16 %v147
    %v286 = vunpack.c.l.b16 %v148
    %v287 = vunpack.c.h.b16 %v148
    %v288 = vunpack.c.l.b16 %v149
    %v289 = vunpack.c.h.b16 %v149
    %v290 = vunpack.c.l.b16 %v150
    %v291 = vunpack.c.h.b16 %v150
    %v292 = vunpack.c.l.b16 %v151
    %v293 = vunpack.c.h.b16 %v151
    %v294 = vunpack.c.l.b16 %v152
    %v295 = vunpack.c.h.b16 %v152
    %v296 = vunpack.c.l.b16 %v153
    %v297 = vunpack.c.h.b16 %v153
    %v298 = vunpack.c.l.b16 %v154
    %v299 = vunpack.c.h.b16 %v154
    %v300 = vunpack.c.l.b16 %v155
    %v301 = vunpack.c.h.b16 %v155
    %v302 = vunpack.c.l.b16 %v156
    %v303 = vunpack.c.h.b16 %v156
    %v304 = vunpack.c.l.b16 %v157
    %v305 = vunpack.c.h.b16 %v157
    %v306 = vunpack.c.l.b16 %v158
    %v307 = vunpack.c.h.b16 %v158
    %v308 = vunpack.c.l.b16 %v159
    %v309 = vunpack.c.h.b16 %v159
    %v310 = vunpack.c.l.b16 %v160
    %v311 = vunpack.c.h.b16 %v160
    %v312 = vunpack.c.l.b16 %v161
    %v313 = vunpack.c.h.b16 %v161
    %v314 = vunpack.c.l.b16 %v162
    %v315 = vunpack.c.h.b16 %v162
    %v316 = vunpack.c.l.b16 %v163
    %v317 = vunpack.c.h.b16 %v163
    %v318 = vunpack.c.l.b16 %v164
    %v319 = vunpack.c.h.b16 %v164
    %v320 = vunpack.c.l.b16 %v165
    %v321 = vunpack.c.h.b16 %v165
    %v322 = vunpack.c.l.b16 %v166
    %v323 = vunpack.c.h.b16 %v166
    %v324 = vunpack.c.l.b16 %v167
    %v325 = vunpack.c.h.b16 %v167
    %v326 = vunpack.c.l.b16 %v168
    %v327 = vunpack.c.h.b16 %v168
    %v328 = vunpack.c.l.b16 %v169
    %v329 = vunpack.c.h.b16 %v169
    %v330 = vunpack.c.l.b16 %v170
    %v331 = vunpack.c.h.b16 %v170
    %v332 = vunpack.c.l.b16 %v171
    %v333 = vunpack.c.h.b16 %v171
    %v334 = vunpack.c.l.b16 %v172
    %v335 = vunpack.c.h.b16 %v172
    %v336 = vunpack.c.l.b16 %v173
    %v337 = vunpack.c.h.b16 %v173
    %v338 = vunpack.c.l.b16 %v174
    %v339 = vunpack.c.h.b16 %v174
    %v340 = vunpack.c.l.b16 %v175
    %v341 = vunpack.c.h.b16 %v175
    %v342 = vunpack.c.l.b16 %v176
    %v343 = vunpack.c.h.b16 %v176
    %v344 = vunpack.c.l.b16 %v177
    %v345 = vunpack.c.h.b16 %v177
    %v346 = vunpack.c.l.b16 %v178
    %v347 = vunpack.c.h.b16 %v178
    %v348 = vunpack.c.l.b16 %v179
    %v349 = vunpack.c.h.b16 %v179
    %v350 = vunpack.c.l.b16 %v180
    %v351 = vunpack.c.h.b16 %v180
    %v352 = vunpack.c.l.b16 %v181
    %v353 = vunpack.c.h.b16 %v181
    %v354 = vunpack.c.l.b16 %v182
    %v355 = vunpack.c.h.b16 %v182
    %v356 = vunpack.c.l.b16 %v183
    %v357 = vunpack.c.h.b16 %v183
    %v358 = vunpack.c.l.b16 %v184
    %v359 = vunpack.c.h.b16 %v184
    %v360 = vunpack.c.l.b16 %v185
    %v361 = vunpack.c.h.b16 %v185
    %v362 = vunpack.c.l.b16 %v186
    %v363 = vunpack.c.h.b16 %v186
    %v364 = vunpack.c.l.b16 %v187
    %v365 = vunpack.c.h.b16 %v187
    %v366 = vunpack.c.l.b16 %v188
    %v367 = vunpack.c.h.b16 %v188
    %v368 = vunpack.c.l.b16 %v189
    %v369 = vunpack.c.h.b16 %v189
    %v370 = vunpack.c.l.b16 %v190
    %v371 = vunpack.c.h.b16 %v190
    %v372 = vunpack.c.l.b16 %v191
    %v373 = vunpack.c.h.b16 %v191
    %v374 = vunpack.c.l.b16 %v192
    %v375 = vunpack.c.h.b16 %v192
    %v376 = vunpack.c.l.b16 %v193
    %v377 = vunpack.c.h.b16 %v193
    %v378 = vunpack.c.l.b16 %v194
    %v379 = vunpack.c.h.b16 %v194
    %v380 = vunpack.c.l.b16 %v195
    %v381 = vunpack.c.h.b16 %v195
    %v382 = vunpack.c.l.b16 %v196
    %v383 = vunpack.c.h.b16 %v196
    %v384 = vunpack.c.l.b16 %v197
    %v385 = vunpack.c.h.b16 %v197
    %v386 = vunpack.c.l.b16 %v198
    %v387 = vunpack.c.h.b16 %v198
    %v388 = vunpack.c.l.b16 %v199
    %v389 = vunpack.c.h.b16 %v199
    %v390 = vunpack.c.l.b16 %v200
    %v391 = vunpack.c.h.b16 %v200
    %v392 = vunpack.c.l.b16 %v201
    %v393 = vunpack.c.h.b16 %v201
    %v394 = vunpack.c.l.b16 %v202
    %v395 = vunpack.c.h.b16 %v202
    %v396 = vunpack.c.l.b16 %v203
    %v397 = vunpack.c.h.b16 %v203
    %v398 = vunpack.c.l.b16 %v204
    %v399 = vunpack.c.h.b16 %v204
    %v400 = vunpack.c.l.b16 %v205
    %v401 = vunpack.c.h.b16 %v205
    %v402 = vunpack.c.l.b16 %v206
    %v403 = vunpack.c.h.b16 %v206
    %v404 = vunpack.c.l.b16 %v207
    %v405 = vunpack.c.h.b16 %v207
    %v406 = vpack.c.b16 %v280, %v278
    %v407 = vpack.c.b16 %v281, %v279
    %v408 = vpack.c.b16 %v284, %v282
    %v409 = vpack.c.b16 %v285, %v283
    %v410 = vpack.c.b16 %v288, %v286
    %v411 = vpack.c.b16 %v289, %v287
    %v412 = vpack.c.b16 %v292, %v290
    %v413 = vpack.c.b16 %v293, %v291
    %v414 = vpack.c.b16 %v296, %v294
    %v415 = vpack.c.b16 %v297, %v295
    %v416 = vpack.c.b16 %v300, %v298
    %v417 = vpack.c.b16 %v301, %v299
    %v418 = vpack.c.b16 %v304, %v302
    %v419 = vpack.c.b16 %v305, %v303
    %v420 = vpack.c.b16 %v308, %v306
    %v421 = vpack.c.b16 %v309, %v307
    %v422 = vpack.c.b16 %v312, %v310
    %v423 = vpack.c.b16 %v313, %v311
    %v424 = vpack.c.b16 %v316, %v314
    %v425 = vpack.c.b16 %v317, %v315
    %v426 = vpack.c.b16 %v320, %v318
    %v427 = vpack.c.b16 %v321, %v319
    %v428 = vpack.c.b16 %v324, %v322
    %v429 = vpack.c.b16 %v325, %v323
    %v430 = vpack.c.b16 %v328, %v326
    %v431 = vpack.c.b16 %v329, %v327
    %v432 = vpack.c.b16 %v332, %v330
    %v433 = vpack.c.b16 %v333, %v331
    %v434 = vpack.c.b16 %v336, %v334
    %v435 = vpack.c.b16 %v337, %v335
    %v436 = vpack.c.b16 %v340, %v338
    %v437 = vpack.c.b16 %v341, %v339
    %v438 = vpack.c.b16 %v344, %v342
    %v439 = vpack.c.b16 %v345, %v343
    %v440 = vpack.c.b16 %v348, %v346
    %v441 = vpack.c.b16 %v349, %v347
    %v442 = vpack.c.b16 %v352, %v350
    %v443 = vpack.c.b16 %v353, %v351
    %v444 = vpack.c.b16 %v356, %v354
    %v445 = vpack.c.b16 %v357, %v355
    %v446 = vpack.c.b16 %v360, %v358
    %v447 = vpack.c.b16 %v361, %v359
    %v448 = vpack.c.b16 %v364, %v362
    %v449 = vpack.c.b16 %v365, %v363
    %v450 = vpack.c.b16 %v368, %v366
    %v451 = vpack.c.b16 %v369, %v367
    %v452 = vpack.c.b16 %v372, %v370
    %v453 = vpack.c.b16 %v373, %v371
    %v454 = vpack.c.b16 %v376, %v374
    %v455 = vpack.c.b16 %v377, %v375
    %v456 = vpack.c.b16 %v380, %v378
    %v457 = vpack.c.b16 %v381, %v379
    %v458 = vpack.c.b16 %v384, %v382
    %v459 = vpack.c.b16 %v385, %v383
    %v460 = vpack.c.b16 %v388, %v386
    %v461 = vpack.c.b16 %v389, %v387
    %v462 = vpack.c.b16 %v392, %v390
    %v463 = vpack.c.b16 %v393, %v391
    %v464 = vpack.c.b16 %v396, %v394
    %v465 = vpack.c.b16 %v397, %v395
    %v466 = vpack.c.b16 %v400, %v398
    %v467 = vpack.c.b16 %v401, %v399
    %v468 = vpack.c.b16 %v404, %v402
    %v469 = vpack.c.b16 %v405, %v403
    %534 = vmatpush.bf16.msra.mxu0 %v420
    %535 = vmatpush.bf16.msra.mxu0 %v418
    %536 = vmatpush.bf16.msra.mxu0 %v416
    %537 = vmatpush.bf16.msra.mxu0 %v414
    %538 = vmatpush.bf16.msra.mxu0 %v412
    %539 = vmatpush.bf16.msra.mxu0 %v410
    %540 = vmatpush.bf16.msra.mxu0 %v408
    %541 = vmatpush.bf16.msra.mxu0 %v406
    %542 = vmatmul.bf16.gmra.mxu0 %v140
    %v543 = vpop.f32.mrf.mxu0
    %v544 = vadd.f32 %v210, %v543
    %v545 = vpop.f32.mrf.mxu0
    %546 = vdwg.mxu0
    %547 = vmatpush.bf16.msra.mxu0 %v436
    %548 = vmatpush.bf16.msra.mxu0 %v434
    %549 = vmatpush.bf16.msra.mxu0 %v432
    %550 = vmatpush.bf16.msra.mxu0 %v430
    %551 = vmatpush.bf16.msra.mxu0 %v428
    %552 = vmatpush.bf16.msra.mxu0 %v426
    %553 = vmatpush.bf16.msra.mxu0 %v424
    %554 = vmatpush.bf16.msra.mxu0 %v422
    %555 = vmatmul.bf16.gmra.mxu0 %v141
    %v556 = vpop.f32.mrf.mxu0
    %v557 = vadd.f32 %v544, %v556
    %v558 = vpop.f32.mrf.mxu0
    %559 = vdwg.mxu0
    %560 = vmatpush.bf16.msra.mxu0 %v452
    %561 = vmatpush.bf16.msra.mxu0 %v450
    %562 = vmatpush.bf16.msra.mxu0 %v448
    %563 = vmatpush.bf16.msra.mxu0 %v446
    %564 = vmatpush.bf16.msra.mxu0 %v444
    %565 = vmatpush.bf16.msra.mxu0 %v442
    %566 = vmatpush.bf16.msra.mxu0 %v440
    %567 = vmatpush.bf16.msra.mxu0 %v438
    %568 = vmatmul.bf16.gmra.mxu0 %v142
    %v569 = vpop.f32.mrf.mxu0
    %v570 = vadd.f32 %v557, %v569
    %v571 = vpop.f32.mrf.mxu0
    %572 = vdwg.mxu0
    %573 = vmatpush.bf16.msra.mxu0 %v468
    %574 = vmatpush.bf16.msra.mxu0 %v466
    %575 = vmatpush.bf16.msra.mxu0 %v464
    %576 = vmatpush.bf16.msra.mxu0 %v462
    %577 = vmatpush.bf16.msra.mxu0 %v460
    %578 = vmatpush.bf16.msra.mxu0 %v458
    %579 = vmatpush.bf16.msra.mxu0 %v456
    %580 = vmatpush.bf16.msra.mxu0 %v454
    %581 = vmatmul.bf16.gmra.mxu0 %v143
    %v582 = vpop.f32.mrf.mxu0
    %v583 = vadd.f32 %v570, %v582
    %v584 = vpop.f32.mrf.mxu0
    %585 = vdwg.mxu0
    %586 = vmatpush.bf16.msra.mxu0 %v421
    %587 = vmatpush.bf16.msra.mxu0 %v419
    %588 = vmatpush.bf16.msra.mxu0 %v417
    %589 = vmatpush.bf16.msra.mxu0 %v415
    %590 = vmatpush.bf16.msra.mxu0 %v413
    %591 = vmatpush.bf16.msra.mxu0 %v411
    %592 = vmatpush.bf16.msra.mxu0 %v409
    %593 = vmatpush.bf16.msra.mxu0 %v407
    %594 = vmatmul.bf16.gmra.mxu0 %v140
    %v595 = vpop.f32.mrf.mxu0
    %v596 = vadd.f32 %v211, %v595
    %v597 = vpop.f32.mrf.mxu0
    %598 = vdwg.mxu0
    %599 = vmatpush.bf16.msra.mxu0 %v437
    %600 = vmatpush.bf16.msra.mxu0 %v435
    %601 = vmatpush.bf16.msra.mxu0 %v433
    %602 = vmatpush.bf16.msra.mxu0 %v431
    %603 = vmatpush.bf16.msra.mxu0 %v429
    %604 = vmatpush.bf16.msra.mxu0 %v427
    %605 = vmatpush.bf16.msra.mxu0 %v425
    %606 = vmatpush.bf16.msra.mxu0 %v423
    %607 = vmatmul.bf16.gmra.mxu0 %v141
    %v608 = vpop.f32.mrf.mxu0
    %v609 = vadd.f32 %v596, %v608
    %v610 = vpop.f32.mrf.mxu0
    %611 = vdwg.mxu0
    %612 = vmatpush.bf16.msra.mxu0 %v453
    %613 = vmatpush.bf16.msra.mxu0 %v451
    %614 = vmatpush.bf16.msra.mxu0 %v449
    %615 = vmatpush.bf16.msra.mxu0 %v447
    %616 = vmatpush.bf16.msra.mxu0 %v445
    %617 = vmatpush.bf16.msra.mxu0 %v443
    %618 = vmatpush.bf16.msra.mxu0 %v441
    %619 = vmatpush.bf16.msra.mxu0 %v439
    %620 = vmatmul.bf16.gmra.mxu0 %v142
    %v621 = vpop.f32.mrf.mxu0
    %v622 = vadd.f32 %v609, %v621
    %v623 = vpop.f32.mrf.mxu0
    %624 = vdwg.mxu0
    %625 = vmatpush.bf16.msra.mxu0 %v469
    %626 = vmatpush.bf16.msra.mxu0 %v467
    %627 = vmatpush.bf16.msra.mxu0 %v465
    %628 = vmatpush.bf16.msra.mxu0 %v463
    %629 = vmatpush.bf16.msra.mxu0 %v461
    %630 = vmatpush.bf16.msra.mxu0 %v459
    %631 = vmatpush.bf16.msra.mxu0 %v457
    %632 = vmatpush.bf16.msra.mxu0 %v455
    %633 = vmatmul.bf16.gmra.mxu0 %v143
    %v634 = vpop.f32.mrf.mxu0
    %v635 = vadd.f32 %v622, %v634
    %v636 = vpop.f32.mrf.mxu0
    %637 = vdwg.mxu0
    %v638 = vmax.f32 %v583, 0.0
    %v639 = vmax.f32 %v635, 0.0
    %v640 = vpack.c.bf16 %v638, %v638
    %v641 = vpack.c.bf16 %v639, %v639
    %v642 = vld [vmem:[%s5] sm:$0xf]
    %v643 = vld [vmem:[%s5 + $0x4] sm:$0xf]
    %v644 = vld [vmem:[%s5 + $0x8] sm:$0xf]
    %v645 = vld [vmem:[%s5 + $0xc] sm:$0xf]
    %v646 = vld [vmem:[%s5 + $0x10] sm:$0xf]
    %v647 = vld [vmem:[%s5 + $0x14] sm:$0xf]
    %v648 = vld [vmem:[%s5 + $0x18] sm:$0xf]
    %v649 = vld [vmem:[%s5 + $0x1c] sm:$0xf]
    %v650 = vld [vmem:[%s5 + $0x20] sm:$0xf]
    %v651 = vld [vmem:[%s5 + $0x24] sm:$0xf]
    %v652 = vld [vmem:[%s5 + $0x28] sm:$0xf]
    %v653 = vld [vmem:[%s5 + $0x2c] sm:$0xf]
    %v654 = vld [vmem:[%s5 + $0x30] sm:$0xf]
    %v655 = vld [vmem:[%s5 + $0x34] sm:$0xf]
    %v656 = vld [vmem:[%s5 + $0x38] sm:$0xf]
    %v657 = vld [vmem:[%s5 + $0x3c] sm:$0xf]
    %v658 = vld [vmem:[%s5 + $0x40] sm:$0xf]
    %v659 = vld [vmem:[%s5 + $0x44] sm:$0xf]
    %v660 = vld [vmem:[%s5 + $0x48] sm:$0xf]
    %v661 = vld [vmem:[%s5 + $0x4c] sm:$0xf]
    %v662 = vld [vmem:[%s5 + $0x50] sm:$0xf]
    %v663 = vld [vmem:[%s5 + $0x54] sm:$0xf]
    %v664 = vld [vmem:[%s5 + $0x58] sm:$0xf]
    %v665 = vld [vmem:[%s5 + $0x5c] sm:$0xf]
    %v666 = vld [vmem:[%s5 + $0x60] sm:$0xf]
    %v667 = vld [vmem:[%s5 + $0x64] sm:$0xf]
    %v668 = vld [vmem:[%s5 + $0x68] sm:$0xf]
    %v669 = vld [vmem:[%s5 + $0x6c] sm:$0xf]
    %v670 = vld [vmem:[%s5 + $0x70] sm:$0xf]
    %v671 = vld [vmem:[%s5 + $0x74] sm:$0xf]
    %v672 = vld [vmem:[%s5 + $0x78] sm:$0xf]
    %v673 = vld [vmem:[%s5 + $0x7c] sm:$0xf]
    %v674 = vld [vmem:[%s6] sm:$0x1]
    %v676 = vperm.slane %v674, 0
    %v710 = vunpack.c.l.b16 %v642
    %v711 = vunpack.c.l.b16 %v643
    %v712 = vunpack.c.l.b16 %v644
    %v713 = vunpack.c.l.b16 %v645
    %v714 = vunpack.c.l.b16 %v646
    %v715 = vunpack.c.l.b16 %v647
    %v716 = vunpack.c.l.b16 %v648
    %v717 = vunpack.c.l.b16 %v649
    %v718 = vunpack.c.l.b16 %v650
    %v719 = vunpack.c.l.b16 %v651
    %v720 = vunpack.c.l.b16 %v652
    %v721 = vunpack.c.l.b16 %v653
    %v722 = vunpack.c.l.b16 %v654
    %v723 = vunpack.c.l.b16 %v655
    %v724 = vunpack.c.l.b16 %v656
    %v725 = vunpack.c.l.b16 %v657
    %v726 = vunpack.c.l.b16 %v658
    %v727 = vunpack.c.l.b16 %v659
    %v728 = vunpack.c.l.b16 %v660
    %v729 = vunpack.c.l.b16 %v661
    %v730 = vunpack.c.l.b16 %v662
    %v731 = vunpack.c.l.b16 %v663
    %v732 = vunpack.c.l.b16 %v664
    %v733 = vunpack.c.l.b16 %v665
    %v734 = vunpack.c.l.b16 %v666
    %v735 = vunpack.c.l.b16 %v667
    %v736 = vunpack.c.l.b16 %v668
    %v737 = vunpack.c.l.b16 %v669
    %v738 = vunpack.c.l.b16 %v670
    %v739 = vunpack.c.l.b16 %v671
    %v740 = vunpack.c.l.b16 %v672
    %v741 = vunpack.c.l.b16 %v673
    %v742 = vpack.c.b16 %v711, %v710
    %v743 = vpack.c.b16 %v713, %v712
    %v744 = vpack.c.b16 %v715, %v714
    %v745 = vpack.c.b16 %v717, %v716
    %v746 = vpack.c.b16 %v719, %v718
    %v747 = vpack.c.b16 %v721, %v720
    %v748 = vpack.c.b16 %v723, %v722
    %v749 = vpack.c.b16 %v725, %v724
    %v750 = vpack.c.b16 %v727, %v726
    %v751 = vpack.c.b16 %v729, %v728
    %v752 = vpack.c.b16 %v731, %v730
    %v753 = vpack.c.b16 %v733, %v732
    %v754 = vpack.c.b16 %v735, %v734
    %v755 = vpack.c.b16 %v737, %v736
    %v756 = vpack.c.b16 %v739, %v738
    %v757 = vpack.c.b16 %v741, %v740
    %774 = vmatpush.bf16.msra.mxu0 %v749
    %775 = vmatpush.bf16.msra.mxu0 %v748
    %776 = vmatpush.bf16.msra.mxu0 %v747
    %777 = vmatpush.bf16.msra.mxu0 %v746
    %778 = vmatpush.bf16.msra.mxu0 %v745
    %779 = vmatpush.bf16.msra.mxu0 %v744
    %780 = vmatpush.bf16.msra.mxu0 %v743
    %781 = vmatpush.bf16.msra.mxu0 %v742
    %782 = vmatmul.bf16.gmra.mxu0 %v640
    %v783 = vpop.f32.mrf.mxu0
    %v784 = vadd.f32 %v676, %v783
    %v785 = vpop.f32.mrf.mxu0
    %786 = vdwg.mxu0
    %787 = vmatpush.bf16.msra.mxu0 %v757
    %788 = vmatpush.bf16.msra.mxu0 %v756
    %789 = vmatpush.bf16.msra.mxu0 %v755
    %790 = vmatpush.bf16.msra.mxu0 %v754
    %791 = vmatpush.bf16.msra.mxu0 %v753
    %792 = vmatpush.bf16.msra.mxu0 %v752
    %793 = vmatpush.bf16.msra.mxu0 %v751
    %794 = vmatpush.bf16.msra.mxu0 %v750
    %795 = vmatmul.bf16.gmra.mxu0 %v641
    %v796 = vpop.f32.mrf.mxu0
    %v797 = vadd.f32 %v784, %v796
    %v798 = vpop.f32.mrf.mxu0
    %799 = vdwg.mxu0
    %v800 = vtanh.pop %v797
    %vm801 = vcmask 15360
    %802 = vst.msk [vmem:[%s7] sm:$0xff] %vm801, %v800
    // Predicated region
    $region34: #{actor_forward.1} parent=1 // pred_check
      _
    $region35: #{actor_forward.1} parent=1 // pred_check_branch
      %804 = sbr.rel (0) target = $region37
    $region36: #{actor_forward.1} parent=1 // pred_region
      _
    $region37: #{actor_forward.1} parent=1 // pred_fallthru
      _
    // Predicated region
    $region38: #{actor_forward.1} parent=1 // pred_check
      _
    $region39: #{actor_forward.1} parent=1 // pred_check_branch
      %806 = sbr.rel (0) target = $region41
    $region40: #{actor_forward.1} parent=1 // pred_region
      _
    $region41: #{actor_forward.1} parent=1 // pred_fallthru
      _
    %807 = vsyncpa [#allocation3], 1

</llo_original>
